<compile_context>
chip_gen: v6e
topology: v6e:2x2x1
jax: 0.10.0
libtpu: 0.0.40
codegen_flags: <defaults>
</compile_context>

<pallas_src>
import numpy as np
import jax
import jax.numpy as jnp
from jax.experimental import pallas as pl
from jax.experimental.pallas import tpu as pltpu


def _round_up(a, b):
    return (a + b - 1) // b * b


def _make_shc_kernel(compute_dtype):
    def kernel(x_ref, w_ref, o_ref):
        # x_ref: (Mtile, V)   w_ref: (V, N)   o_ref: (Mtile, N)
        a = x_ref[...].astype(compute_dtype)   # no-op in the f32 path
        o_ref[...] = jnp.dot(
            a, w_ref[...], preferred_element_type=jnp.float32
        ).astype(o_ref.dtype)
    return kernel


def shell_compute_shc(x, shell_inverse, s2sh_list, use_bf16=None):
    """ShellComputeSHC.forward.

    Args:
      x: (B, Cin, V) jax array.
      shell_inverse: numpy int array (V,), shell index of each direction (static).
      s2sh_list: list of S numpy arrays, each (Vi, C) (static buffers).
      use_bf16: None -> auto (bf16 MXU operands iff x is already a 16-bit float,
        so the HBM read of x is already halved upstream); True -> force bf16
        operands (x tiles are cast inside the kernel, f32 accumulation); False ->
        f32 operands (bitwise-equivalent to the reference contraction order-wise).

    Returns:
      (B, Cin, S, C) array with dtype of x (matches x.new_zeros in the module).
    """
    B, Cin, V = x.shape
    S = len(s2sh_list)
    C = int(s2sh_list[0].shape[1])
    M = B * Cin
    N = S * C

    # ---- static (trace-time) preprocessing ---------------------------------
    shell_inverse = np.asarray(shell_inverse)
    assert shell_inverse.shape[0] == V

    if use_bf16 is None:
        bf16_compute = jnp.dtype(x.dtype).itemsize <= 2
    else:
        bf16_compute = bool(use_bf16)
    compute_dtype = jnp.bfloat16 if bf16_compute else jnp.float32
    out_dtype = x.dtype

    # Block-structured weight with the gather folded in: rows of S2SH_i are
    # scattered at the ORIGINAL column positions of x (ascending index within
    # each shell, exactly matching the reference boolean-mask gather order).
    W_np = np.zeros((V, N), dtype=np.float32)
    for i, w in enumerate(s2sh_list):
        idx = np.where(shell_inverse == i)[0]          # ascending original order
        W_np[idx, i * C:(i + 1) * C] = np.asarray(w, dtype=np.float32)
    w_op = jnp.asarray(W_np, dtype=compute_dtype)

    # ---- operand layout: no copies, no pads --------------------------------
    x2 = x.reshape(M, V)                                # metadata-only reshape

    x_item = jnp.dtype(x.dtype).itemsize
    w_item = jnp.dtype(compute_dtype).itemsize
    o_item = jnp.dtype(out_dtype).itemsize

    # ---- tile selection (VMEM-budgeted, >=2 grid steps for v7x when possible)
    def footprint(mt):
        # 2 buffers for x tiles + 2 for the (constant, tiny) W + 2 for out tiles.
        return 2 * mt * V * x_item + 2 * V * N * w_item + 2 * mt * N * o_item

    VMEM_BUDGET = 20 * 1024 * 1024
    Mtile = 512
    while Mtile > 8 and footprint(Mtile) > VMEM_BUDGET:
        Mtile //= 2
    # v7x has 2 TensorCores: if the whole problem fits in one tile, split it so
    # the "parallel" grid axis has >= 2 steps (no-op on 1-TC v5e/v6e).
    if M > 8 and Mtile >= M:
        Mtile = max(8, _round_up((M + 1) // 2, 8))
    Mtile = min(Mtile, max(8, _round_up(M, 8)))
    Mtile = _round_up(Mtile, 8)

    grid_m = pl.cdiv(M, Mtile)

    cost = pl.CostEstimate(
        flops=2 * M * V * N,
        transcendentals=0,
        bytes_accessed=M * V * x_item + V * N * w_item + M * N * o_item,
    )

    out = pl.pallas_call(
        _make_shc_kernel(compute_dtype),
        out_shape=jax.ShapeDtypeStruct((M, N), out_dtype),
        grid=(grid_m,),
        in_specs=[
            # x tile: last dim = full V (full-extent block dim, no 128 pad needed)
            pl.BlockSpec((Mtile, V), lambda m: (m, 0)),
            # W: constant index_map -> DMA'd once, reused for every M tile.
            # (W is tiny, so its default double-buffer costs negligible VMEM.)
            pl.BlockSpec((V, N), lambda m: (0, 0)),
        ],
        out_specs=pl.BlockSpec((Mtile, N), lambda m: (m, 0)),
        compiler_params=pltpu.CompilerParams(
            # M tiles are independent -> shard across TensorCores (v7x megacore).
            dimension_semantics=("parallel",),
            # Covers v5e's 16 MiB scoped default; within v7x's 64 MiB physical.
            vmem_limit_bytes=32 * 1024 * 1024,
        ),
        cost_estimate=cost,
    )(x2, w_op)                                          # (M, N)

    # (M, S*C) -> (B, Cin, S, C): contiguous, metadata-only reshape.
    return out.reshape(B, Cin, S, C)


def _reference(x, shell_inverse, s2sh_list):
    B, Cin, V = x.shape
    S = len(s2sh_list)
    C = s2sh_list[0].shape[1]
    y = np.zeros((B, Cin, S, C), dtype=np.float32)
    xn = np.asarray(x, dtype=np.float32)
    for i, w in enumerate(s2sh_list):
        idx = np.where(shell_inverse == i)[0]
        y[:, :, i] = xn[:, :, idx] @ np.asarray(w, dtype=np.float32)
    return y


if __name__ == "__main__":
    # Synthetic shell sampling (deterministic): 3 shells of sizes 6, 10, 8; C = 15.
    B, Cin = 2, 4
    shell_sizes = [6, 10, 8]
    S = len(shell_sizes)
    V = sum(shell_sizes)
    C = 15

    rng_np = np.random.default_rng(0)
    shell_inverse = rng_np.permutation(
        np.concatenate([np.full(n, i, dtype=np.int32) for i, n in enumerate(shell_sizes)])
    )

    key = jax.random.PRNGKey(0)
    keys = jax.random.split(key, S + 1)
    s2sh_list = [
        np.asarray(jax.random.normal(keys[i], (shell_sizes[i], C), dtype=jnp.float32))
        for i in range(S)
    ]
    x = jax.random.normal(keys[S], (B, Cin, V), dtype=jnp.float32)

    y_ref = _reference(x, shell_inverse, s2sh_list)

    # f32 path: matches the PyTorch reference tightly.
    y = jax.block_until_ready(shell_compute_shc(x, shell_inverse, s2sh_list, use_bf16=False))
    np.testing.assert_allclose(np.asarray(y), y_ref, rtol=1e-4, atol=1e-4)

    # bf16-operand path (f32 accumulation): looser tolerance by construction.
    y_bf16 = jax.block_until_ready(shell_compute_shc(x, shell_inverse, s2sh_list, use_bf16=True))
    np.testing.assert_allclose(np.asarray(y_bf16), y_ref, rtol=5e-2, atol=5e-2)

    print("KERNEL_OK")
</pallas_src>

<mosaic_0001>
module attributes {stable_mosaic.version = 11 : i64} {
  func.func @kernel(%arg0: i32, %arg1: memref<8x24xf32, #tpu.memory_space<vmem>>, %arg2: memref<24x45xf32, #tpu.memory_space<vmem>>, %arg3: memref<8x45xf32, #tpu.memory_space<vmem>>) attributes {dimension_semantics = [#tpu.dimension_semantics<parallel>], iteration_bounds = array<i64: 1>, scalar_prefetch = 0 : i64, scratch_operands = 0 : i64, tpu.core_type = #tpu.core_type<tc>, window_params = [{transform_indices = @transform_0, window_bounds = array<i64: 8, 24>}, {pipeline_mode = #tpu.pipeline_mode<synchronous>, transform_indices = @transform_1, window_bounds = array<i64: 24, 45>}, {transform_indices = @transform_2, window_bounds = array<i64: 8, 45>}]} {
    %c0 = arith.constant 0 : index
    %c0_0 = arith.constant 0 : index
    %0 = vector.load %arg1[%c0, %c0_0] : memref<8x24xf32, #tpu.memory_space<vmem>>, vector<8x24xf32>
    %c0_1 = arith.constant 0 : index
    %c0_2 = arith.constant 0 : index
    %1 = vector.load %arg2[%c0_1, %c0_2] : memref<24x45xf32, #tpu.memory_space<vmem>>, vector<24x45xf32>
    %cst = arith.constant dense<0.000000e+00> : vector<8x45xf32>
    %2 = tpu.matmul %0, %1, %cst {dimension_numbers = #tpu.dot_dimension_numbers<[1], [0], [0], [1], [0, 0, 1, 1], [], []>} : vector<8x24xf32>, vector<24x45xf32>, vector<8x45xf32> -> vector<8x45xf32>
    %c0_3 = arith.constant 0 : index
    %c0_4 = arith.constant 0 : index
    %3 = vector.load %arg3[%c0_3, %c0_4] : memref<8x45xf32, #tpu.memory_space<vmem>>, vector<8x45xf32>
    tpu.vector_store %arg3[%c0_3, %c0_4], %2 {strides = array<i32>} : memref<8x45xf32, #tpu.memory_space<vmem>>, vector<8x45xf32>,
    return
  }
  func.func @transform_0(%arg0: i32) -> (i32, i32) {
    %c0_i32 = arith.constant 0 : i32
    %c0_i32_0 = arith.constant 0 : i32
    return %arg0, %c0_i32 : i32, i32
  }
  func.func @transform_1(%arg0: i32) -> (i32, i32) {
    %c0_i32 = arith.constant 0 : i32
    %c0_i32_0 = arith.constant 0 : i32
    %c0_i32_1 = arith.constant 0 : i32
    return %c0_i32, %c0_i32_0 : i32, i32
  }
  func.func @transform_2(%arg0: i32) -> (i32, i32) {
    %c0_i32 = arith.constant 0 : i32
    %c0_i32_0 = arith.constant 0 : i32
    return %arg0, %c0_i32 : i32, i32
  }
}

</mosaic_0001>

<llo_original>
// kernel: tpu_custom_call.1
$region0: #{tpu_custom_call.1}
  #allocation0 [shape = 'u32[]', space=smem, size = 0x4, offset = 0x4, fixed_abs, tag = 'smem constant byte address 0x4 - core index']
  #allocation1 [shape = 'u32[144,128]{1,0:T(1,128)}', space=vmem, size = 0x12000, scoped, tag = 'internal scratch']
  %s0 = inlined_call_operand.hbm [shape: f32[8,24], index: 0, kind: input, shape index: {}]
  %s1 = inlined_call_operand.hbm [shape: f32[24,45], index: 1, kind: input, shape index: {}]
  %s2 = inlined_call_operand.hbm [shape: f32[8,45], index: 2, kind: output, shape index: {}]
  %s3 = sld [smem:[#allocation0]]
  $region26: #{tpu_custom_call.1} parent=0
    _
  %s5 = ssub.s32 1, %s3
  %s6 = scalar_select 0, %s5, %s3
  $region1: #{tpu_custom_call.1} parent=0
    #allocation2 [shape = 'u8[4096]{0}', space=vmem, size = 0x1000, scoped, tag = 'input window, operand 0, single buffered']
    #allocation3 [shape = 's32[1]{0}', space=sflag, size = 0x4, scoped, tag = 'scoped memory for tpu_custom_call.1']
    #allocation4 [shape = 's32[1]{0}', space=sflag, size = 0x4, scoped, tag = 'scoped memory for tpu_custom_call.1']
    #allocation5 [shape = 'u8[12288]{0}', space=vmem, size = 0x3000, scoped, tag = 'input window, operand 1, single buffered']
    #allocation6 [shape = 's32[1]{0}', space=sflag, size = 0x4, scoped, tag = 'scoped memory for tpu_custom_call.1']
    #allocation7 [shape = 'u8[4096]{0}', space=vmem, size = 0x1000, scoped, tag = 'output window, operand 0, single buffered']
    %7 = vsyncpa [#allocation3], 0
    %8 = vsyncpa [#allocation6], 0
    %9 = vsyncpa [#allocation4], 0
    // Predicated region
    $region2: #{tpu_custom_call.1} parent=1 // pred_check
      _
    $region3: #{tpu_custom_call.1} parent=1 // pred_check_branch
      %11 = sbr.rel (0) target = $region5
    $region4: #{tpu_custom_call.1} parent=1 // pred_region
      %s13 = ssub.s32 128, 128
      %14 = vsyncadd [#allocation3], %s13
      %s16 = sshll.u32 [#allocation2], 4
      %s17 = int_to_ptr.vmem [resolvable:$true] %s16
      %19 = dma.hbm_to_vmem [thread:$0]  %s0, 128, %s17, [#allocation3]
    $region5: #{tpu_custom_call.1} parent=1 // pred_fallthru
      _
    // Predicated region
    $region6: #{tpu_custom_call.1} parent=1 // pred_check
      _
    $region7: #{tpu_custom_call.1} parent=1 // pred_check_branch
      %21 = sbr.rel (0) target = $region9
    $region8: #{tpu_custom_call.1} parent=1 // pred_region
      %s23 = ssub.s32 384, 384
      %24 = vsyncadd [#allocation6], %s23
      %s25 = sshll.u32 [#allocation5], 4
      %s26 = int_to_ptr.vmem [resolvable:$true] %s25
      %31 = dma.hbm_to_vmem [thread:$0]  %s1, 384, %s26, [#allocation6], 128, 128, 8
    $region9: #{tpu_custom_call.1} parent=1 // pred_fallthru
      _
    // Predicated region
    $region10: #{tpu_custom_call.1} parent=1 // pred_check
      _
    $region11: #{tpu_custom_call.1} parent=1 // pred_check_branch
      %33 = sbr.rel (0) target = $region13
    $region12: #{tpu_custom_call.1} parent=1 // pred_region
      %34 = dma.done [#allocation3], 128
    $region13: #{tpu_custom_call.1} parent=1 // pred_fallthru
      _
    // Predicated region
    $region14: #{tpu_custom_call.1} parent=1 // pred_check
      _
    $region15: #{tpu_custom_call.1} parent=1 // pred_check_branch
      %36 = sbr.rel (0) target = $region17
    $region16: #{tpu_custom_call.1} parent=1 // pred_region
      %37 = dma.done [#allocation6], 384
    $region17: #{tpu_custom_call.1} parent=1 // pred_fallthru
      _
    %v38 = vld [vmem:[#allocation2] sm:$0xff]
    %v39 = vld [vmem:[#allocation5] sm:$0xff]
    %v40 = vld [vmem:[#allocation5 + $0x8] sm:$0xff]
    %v41 = vld [vmem:[#allocation5 + $0x10] sm:$0xff]
    %vm42 = vcmask 195584
    %v44 = vsel %vm42, %v38, 0
    %46 = vmatprep.subr.mxu0 0.0
    %47 = vmatpush1.msra.mxu0 0.0
    %48 = vmatprep.subr.mxu0 0.0
    %49 = vmatpush1.msra.mxu0 0.0
    %50 = vmatprep.subr.mxu0 0.0
    %51 = vmatpush1.msra.mxu0 0.0
    %52 = vmatprep.subr.mxu0 0.0
    %53 = vmatpush1.msra.mxu0 0.0
    %54 = vmatprep.subr.mxu0 0.0
    %55 = vmatpush1.msra.mxu0 0.0
    %56 = vmatprep.subr.mxu0 0.0
    %57 = vmatpush1.msra.mxu0 0.0
    %58 = vmatprep.subr.mxu0 0.0
    %59 = vmatpush1.msra.mxu0 0.0
    %60 = vmatprep.subr.mxu0 0.0
    %61 = vmatpush1.msra.mxu0 0.0
    %62 = vmatprep.subr.mxu0 0.0
    %63 = vmatpush1.msra.mxu0 0.0
    %64 = vmatprep.subr.mxu0 0.0
    %65 = vmatpush1.msra.mxu0 0.0
    %66 = vmatprep.subr.mxu0 0.0
    %67 = vmatpush1.msra.mxu0 0.0
    %68 = vmatprep.subr.mxu0 0.0
    %69 = vmatpush1.msra.mxu0 0.0
    %70 = vmatprep.subr.mxu0 0.0
    %71 = vmatpush1.msra.mxu0 0.0
    %72 = vmatprep.subr.mxu0 0.0
    %73 = vmatpush1.msra.mxu0 %v41
    %74 = vmatprep.subr.mxu0 0.0
    %75 = vmatpush1.msra.mxu0 %v40
    %76 = vmatprep.subr.mxu0 0.0
    %77 = vmatpush1.msra.mxu0 %v39
    %78 = vmatprep.subr.mxu0 0.0
    %79 = vmatpush2.msra.mxu0 0.0
    %80 = vmatprep.subr.mxu0 0.0
    %81 = vmatpush2.msra.mxu0 0.0
    %82 = vmatprep.subr.mxu0 0.0
    %83 = vmatpush2.msra.mxu0 0.0
    %84 = vmatprep.subr.mxu0 0.0
    %85 = vmatpush2.msra.mxu0 0.0
    %86 = vmatprep.subr.mxu0 0.0
    %87 = vmatpush2.msra.mxu0 0.0
    %88 = vmatprep.subr.mxu0 0.0
    %89 = vmatpush2.msra.mxu0 0.0
    %90 = vmatprep.subr.mxu0 0.0
    %91 = vmatpush2.msra.mxu0 0.0
    %92 = vmatprep.subr.mxu0 0.0
    %93 = vmatpush2.msra.mxu0 0.0
    %94 = vmatprep.subr.mxu0 0.0
    %95 = vmatpush2.msra.mxu0 0.0
    %96 = vmatprep.subr.mxu0 0.0
    %97 = vmatpush2.msra.mxu0 0.0
    %98 = vmatprep.subr.mxu0 0.0
    %99 = vmatpush2.msra.mxu0 0.0
    %100 = vmatprep.subr.mxu0 0.0
    %101 = vmatpush2.msra.mxu0 0.0
    %102 = vmatprep.subr.mxu0 0.0
    %103 = vmatpush2.msra.mxu0 0.0
    %104 = vmatprep.subr.mxu0 0.0
    %105 = vmatpush2.msra.mxu0 0.0
    %106 = vmatprep.subr.mxu0 0.0
    %107 = vmatpush2.msra.mxu0 0.0
    %108 = vmatprep.subr.mxu0 0.0
    %109 = vmatpush2.msra.mxu0 0.0
    %110 = vmatprep.mubr.f32.mxu0 0.0
    %111 = vmatmul.mubr.f32.gmra.mxu0 %v44
    %v112 = vpop.f32.mrf.mxu0
    %v113 = vadd.f32 0.0, %v112
    %v114 = vpop.f32.mrf.mxu0
    %115 = vdwg.mxu0
    %vm116 = vcmask 367616
    %117 = vst.msk [vmem:[#allocation7] sm:$0xff] %vm116, %v113
    // Predicated region
    $region18: #{tpu_custom_call.1} parent=1 // pred_check
      _
    $region19: #{tpu_custom_call.1} parent=1 // pred_check_branch
      %119 = sbr.rel (0) target = $region21
    $region20: #{tpu_custom_call.1} parent=1 // pred_region
      %s121 = ssub.s32 128, 128
      %122 = vsyncadd [#allocation4], %s121
      %s124 = sshll.u32 [#allocation7], 4
      %s125 = int_to_ptr.vmem [resolvable:$true] %s124
      %127 = dma.vmem_to_hbm [thread:$0]  %s125, 128, %s2, [#allocation4]
    $region21: #{tpu_custom_call.1} parent=1 // pred_fallthru
      _
    // Predicated region
    $region22: #{tpu_custom_call.1} parent=1 // pred_check
      _
    $region23: #{tpu_custom_call.1} parent=1 // pred_check_branch
      %129 = sbr.rel (0) target = $region25
    $region24: #{tpu_custom_call.1} parent=1 // pred_region
      %130 = dma.done [#allocation4], 128
    $region25: #{tpu_custom_call.1} parent=1 // pred_fallthru
      _
    %131 = vsyncpa [#allocation3], 1
    %132 = vsyncpa [#allocation6], 1
    %133 = vsyncpa [#allocation4], 1

</llo_original>
